<compile_context>
chip_gen: v6e
topology: v6e:2x2x1
jax: 0.10.0
libtpu: 0.0.40
codegen_flags: <defaults>
</compile_context>

<pallas_src>
import functools

import jax
import jax.numpy as jnp
from jax import lax
from jax.experimental import pallas as pl
from jax.experimental.pallas import tpu as pltpu

LANE = 128
TM_MAX = 1024   # lane-tile upper bound
NCORES = 2      # leading 'parallel' axis -> 2nd TensorCore on v7x; harmless on v5e/v6e


def _cdiv(a, b):
    return -(-a // b)


def _round_up(a, b):
    return _cdiv(a, b) * b


# ---------------------------------------------------------------------------
# Fused kernel: per lane-tile of M, compute
#   o = relu(W1^T x + b); d = o - t; f = Wf^T d; acc += mask * f*f
# acc is the (feat, tm) output block, resident in VMEM across the reduction axis.
# ---------------------------------------------------------------------------
def _fused_kernel(x_ref, t_ref, w1t_ref, b_ref, wft_ref, acc_ref, *,
                  m_total, tm, steps):
    c = pl.program_id(0)   # parallel (per-core) axis
    j = pl.program_id(1)   # reduction axis (last, 'arbitrary')

    @pl.when(j == 0)
    def _():
        acc_ref[...] = jnp.zeros_like(acc_ref)

    # model: pointwise (1x1) conv + bias + ReLU  (channels on sublanes, M on lanes)
    o = jnp.maximum(
        jnp.dot(w1t_ref[...], x_ref[...], preferred_element_type=jnp.float32)
        + b_ref[...],
        0.0,
    )
    # loss_model applied once to the difference: (o - t) @ Wf == o@Wf - t@Wf
    d = o - t_ref[...]
    f = jnp.dot(wft_ref[...], d, preferred_element_type=jnp.float32)

    # mask lanes whose global column index >= M (tail tile / overhang steps)
    tile = c * steps + j
    col = tile * tm + lax.broadcasted_iota(jnp.int32, (1, tm), 1)
    contrib = jnp.where(col < m_total, f * f, 0.0)

    # per-lane partial sums; the single cross-lane reduction is done in the wrapper
    acc_ref[...] += contrib


# ---------------------------------------------------------------------------
# FullModel.forward equivalent
# ---------------------------------------------------------------------------
def full_model_forward(x_nchw, target_nchw, params, norm):
    """x: [N, Cin, H, W], target: [N, Cout, H, W] -> scalar loss."""
    w1, b1, wf = params
    n, cin, h, w = x_nchw.shape
    cout = w1.shape[1]
    feat = wf.shape[1]
    m_total = n * h * w

    # Lane-dense layout: M = N*H*W on lanes (last axis), channels on sublanes.
    x_cm = jnp.transpose(x_nchw, (1, 0, 2, 3)).reshape(cin, m_total)
    t_cm = jnp.transpose(target_nchw, (1, 0, 2, 3)).reshape(cout, m_total)
    w1t = jnp.transpose(w1).astype(jnp.float32)          # [cout, cin]
    wft = jnp.transpose(wf).astype(jnp.float32)          # [feat, cout]
    b_col = b1.reshape(cout, 1).astype(jnp.float32)      # [cout, 1]

    # Lane tile: multiple of 128, big (>=512 when M allows), capped for VMEM headroom.
    tm = min(TM_MAX, max(LANE, _round_up(_cdiv(m_total, NCORES), LANE)))
    total_tiles = _cdiv(m_total, tm)
    steps = _cdiv(total_tiles, NCORES)

    def tile_idx(c, j):
        # Clamp so DMAs of (fully masked) overhang steps stay in bounds.
        return jnp.minimum(c * steps + j, total_tiles - 1)

    kernel = functools.partial(_fused_kernel, m_total=m_total, tm=tm, steps=steps)

    partials = pl.pallas_call(
        kernel,
        out_shape=jax.ShapeDtypeStruct((NCORES, feat, tm), jnp.float32),
        grid=(NCORES, steps),
        in_specs=[
            pl.BlockSpec((cin, tm), lambda c, j: (0, tile_idx(c, j))),    # x tile
            pl.BlockSpec((cout, tm), lambda c, j: (0, tile_idx(c, j))),   # target tile
            pl.BlockSpec((cout, cin), lambda c, j: (0, 0)),               # W1^T
            pl.BlockSpec((cout, 1), lambda c, j: (0, 0)),                 # bias column
            pl.BlockSpec((feat, cout), lambda c, j: (0, 0)),              # Wf^T
        ],
        out_specs=pl.BlockSpec((None, feat, tm), lambda c, j: (c, 0, 0)),
        compiler_params=pltpu.CompilerParams(
            dimension_semantics=("parallel", "arbitrary")),
    )(x_cm, t_cm, w1t, b_col, wft)

    # Tiny final reduction + mean (true M denominator) + norm.
    denom = jnp.float32(m_total) * jnp.float32(feat) * jnp.float32(norm)
    return jnp.sum(partials) / denom


# ---------------------------------------------------------------------------
# Pure-JAX reference
# ---------------------------------------------------------------------------
def _reference(x_nchw, target_nchw, params, norm):
    w1, b1, wf = params
    n, cin, h, w = x_nchw.shape
    cout = w1.shape[1]
    x2d = jnp.transpose(x_nchw, (0, 2, 3, 1)).reshape(n * h * w, cin)
    t2d = jnp.transpose(target_nchw, (0, 2, 3, 1)).reshape(n * h * w, cout)
    o = jnp.maximum(x2d @ w1 + b1, 0.0)
    return jnp.mean((o @ wf - t2d @ wf) ** 2) / norm


if __name__ == "__main__":
    key = jax.random.PRNGKey(0)
    k_x, k_t, k_w1, k_b1, k_wf = jax.random.split(key, 5)

    N, CIN, H, W = 2, 4, 16, 16
    COUT, FEAT = 8, 16
    NORM = 2.5

    x = jax.random.normal(k_x, (N, CIN, H, W), dtype=jnp.float32)
    target = jax.random.normal(k_t, (N, COUT, H, W), dtype=jnp.float32)

    w1 = jax.random.normal(k_w1, (CIN, COUT), dtype=jnp.float32) * 0.1
    b1 = jax.random.normal(k_b1, (COUT,), dtype=jnp.float32) * 0.1
    wf = jax.random.normal(k_wf, (COUT, FEAT), dtype=jnp.float32) * 0.1
    params = (w1, b1, wf)

    loss = jax.block_until_ready(full_model_forward(x, target, params, NORM))
    ref = jax.block_until_ready(_reference(x, target, params, NORM))

    assert jnp.allclose(loss, ref, rtol=1e-5, atol=1e-6), (loss, ref)
    print("KERNEL_OK")
</pallas_src>

<mosaic_0001>
module attributes {stable_mosaic.version = 11 : i64} {
  func.func @_fused_kernel(%arg0: i32, %arg1: i32, %arg2: memref<4x256xf32, #tpu.memory_space<vmem>>, %arg3: memref<8x256xf32, #tpu.memory_space<vmem>>, %arg4: memref<8x4xf32, #tpu.memory_space<vmem>>, %arg5: memref<8x1xf32, #tpu.memory_space<vmem>>, %arg6: memref<16x8xf32, #tpu.memory_space<vmem>>, %arg7: memref<1x16x256xf32, #tpu.memory_space<vmem>>) attributes {dimension_semantics = [#tpu.dimension_semantics<parallel>, #tpu.dimension_semantics<arbitrary>], iteration_bounds = array<i64: 2, 1>, scalar_prefetch = 0 : i64, scratch_operands = 0 : i64, tpu.core_type = #tpu.core_type<tc>, window_params = [{transform_indices = @transform_0, window_bounds = array<i64: 4, 256>}, {transform_indices = @transform_1, window_bounds = array<i64: 8, 256>}, {pipeline_mode = #tpu.pipeline_mode<synchronous>, transform_indices = @transform_2, window_bounds = array<i64: 8, 4>}, {pipeline_mode = #tpu.pipeline_mode<synchronous>, transform_indices = @transform_3, window_bounds = array<i64: 8, 1>}, {pipeline_mode = #tpu.pipeline_mode<synchronous>, transform_indices = @transform_4, window_bounds = array<i64: 16, 8>}, {transform_indices = @transform_5, window_bounds = array<i64: 1, 16, 256>}]} {
    %c0_i32 = arith.constant 0 : i32
    %0 = arith.cmpi eq, %arg1, %c0_i32 : i32
    %1 = arith.extui %0 : i1 to i32
    %c0_i32_0 = arith.constant 0 : i32
    %2 = arith.cmpi ne, %1, %c0_i32_0 : i32
    scf.if %2 {
      %cst_19 = arith.constant 0.000000e+00 : f32
      %34 = vector.broadcast %cst_19 : f32 to vector<16x256xf32>
      %c0_20 = arith.constant 0 : index
      %c0_21 = arith.constant 0 : index
      %c0_22 = arith.constant 0 : index
      %35 = vector.load %arg7[%c0_20, %c0_21, %c0_22] : memref<1x16x256xf32, #tpu.memory_space<vmem>>, vector<1x16x256xf32>
      %36 = vector.shape_cast %35 : vector<1x16x256xf32> to vector<16x256xf32>
      %37 = vector.shape_cast %34 : vector<16x256xf32> to vector<1x16x256xf32>
      tpu.vector_store %arg7[%c0_20, %c0_21, %c0_22], %37 {strides = array<i32>} : memref<1x16x256xf32, #tpu.memory_space<vmem>>, vector<1x16x256xf32>,
    } else {
    }
    %c0 = arith.constant 0 : index
    %c0_1 = arith.constant 0 : index
    %3 = vector.load %arg4[%c0, %c0_1] : memref<8x4xf32, #tpu.memory_space<vmem>>, vector<8x4xf32>
    %c0_2 = arith.constant 0 : index
    %c0_3 = arith.constant 0 : index
    %4 = vector.load %arg2[%c0_2, %c0_3] : memref<4x256xf32, #tpu.memory_space<vmem>>, vector<4x256xf32>
    %cst = arith.constant dense<0.000000e+00> : vector<8x256xf32>
    %5 = tpu.matmul %3, %4, %cst {dimension_numbers = #tpu.dot_dimension_numbers<[1], [0], [0], [1], [0, 0, 1, 1], [], []>} : vector<8x4xf32>, vector<4x256xf32>, vector<8x256xf32> -> vector<8x256xf32>
    %c0_4 = arith.constant 0 : index
    %c0_5 = arith.constant 0 : index
    %6 = vector.load %arg5[%c0_4, %c0_5] : memref<8x1xf32, #tpu.memory_space<vmem>>, vector<8x1xf32>
    %7 = vector.broadcast %6 : vector<8x1xf32> to vector<8x256xf32>
    %8 = arith.addf %5, %7 : vector<8x256xf32>
    %cst_6 = arith.constant 0.000000e+00 : f32
    %9 = vector.broadcast %cst_6 : f32 to vector<8x256xf32>
    %10 = arith.maximumf %8, %9 : vector<8x256xf32>
    %c0_7 = arith.constant 0 : index
    %c0_8 = arith.constant 0 : index
    %11 = vector.load %arg3[%c0_7, %c0_8] : memref<8x256xf32, #tpu.memory_space<vmem>>, vector<8x256xf32>
    %12 = arith.subf %10, %11 : vector<8x256xf32>
    %c0_9 = arith.constant 0 : index
    %c0_10 = arith.constant 0 : index
    %13 = vector.load %arg6[%c0_9, %c0_10] : memref<16x8xf32, #tpu.memory_space<vmem>>, vector<16x8xf32>
    %cst_11 = arith.constant dense<0.000000e+00> : vector<16x256xf32>
    %14 = tpu.matmul %13, %12, %cst_11 {dimension_numbers = #tpu.dot_dimension_numbers<[1], [0], [0], [1], [0, 0, 1, 1], [], []>} : vector<16x8xf32>, vector<8x256xf32>, vector<16x256xf32> -> vector<16x256xf32>
    %c1_i32 = arith.constant 1 : i32
    %15 = arith.muli %arg0, %c1_i32 : i32
    %16 = arith.addi %15, %arg1 : i32
    %c256_i32 = arith.constant 256 : i32
    %17 = arith.muli %16, %c256_i32 : i32
    %18 = tpu.iota {dimensions = array<i32: 1>} : vector<1x256xi32>
    %19 = vector.broadcast %17 : i32 to vector<1x256xi32>
    %20 = arith.addi %19, %18 : vector<1x256xi32>
    %c512_i32 = arith.constant 512 : i32
    %21 = vector.broadcast %c512_i32 : i32 to vector<1x256xi32>
    %22 = arith.cmpi slt, %20, %21 : vector<1x256xi32>
    %23 = arith.mulf %14, %14 : vector<16x256xf32>
    %cst_12 = arith.constant 0.000000e+00 : f32
    %24 = vector.shape_cast %22 : vector<1x256xi1> to vector<1x256xi1>
    %25 = vector.broadcast %24 : vector<1x256xi1> to vector<16x256xi1>
    %26 = vector.broadcast %cst_12 : f32 to vector<16x256xf32>
    %27 = arith.select %25, %23, %26 : vector<16x256xi1>, vector<16x256xf32>
    %c0_13 = arith.constant 0 : index
    %c0_14 = arith.constant 0 : index
    %c0_15 = arith.constant 0 : index
    %28 = vector.load %arg7[%c0_13, %c0_14, %c0_15] : memref<1x16x256xf32, #tpu.memory_space<vmem>>, vector<1x16x256xf32>
    %29 = vector.shape_cast %28 : vector<1x16x256xf32> to vector<16x256xf32>
    %30 = arith.addf %29, %27 : vector<16x256xf32>
    %c0_16 = arith.constant 0 : index
    %c0_17 = arith.constant 0 : index
    %c0_18 = arith.constant 0 : index
    %31 = vector.load %arg7[%c0_16, %c0_17, %c0_18] : memref<1x16x256xf32, #tpu.memory_space<vmem>>, vector<1x16x256xf32>
    %32 = vector.shape_cast %31 : vector<1x16x256xf32> to vector<16x256xf32>
    %33 = vector.shape_cast %30 : vector<16x256xf32> to vector<1x16x256xf32>
    tpu.vector_store %arg7[%c0_16, %c0_17, %c0_18], %33 {strides = array<i32>} : memref<1x16x256xf32, #tpu.memory_space<vmem>>, vector<1x16x256xf32>,
    return
  }
  func.func @transform_0(%arg0: i32, %arg1: i32) -> (i32, i32) {
    %c1_i32 = arith.constant 1 : i32
    %0 = arith.muli %arg0, %c1_i32 : i32
    %1 = arith.addi %0, %arg1 : i32
    %c1_i32_0 = arith.constant 1 : i32
    %2 = arith.minsi %1, %c1_i32_0 : i32
    %c0_i32 = arith.constant 0 : i32
    %c0_i32_1 = arith.constant 0 : i32
    return %c0_i32, %2 : i32, i32
  }
  func.func @transform_1(%arg0: i32, %arg1: i32) -> (i32, i32) {
    %c1_i32 = arith.constant 1 : i32
    %0 = arith.muli %arg0, %c1_i32 : i32
    %1 = arith.addi %0, %arg1 : i32
    %c1_i32_0 = arith.constant 1 : i32
    %2 = arith.minsi %1, %c1_i32_0 : i32
    %c0_i32 = arith.constant 0 : i32
    %c0_i32_1 = arith.constant 0 : i32
    return %c0_i32, %2 : i32, i32
  }
  func.func @transform_2(%arg0: i32, %arg1: i32) -> (i32, i32) {
    %c0_i32 = arith.constant 0 : i32
    %c0_i32_0 = arith.constant 0 : i32
    %c0_i32_1 = arith.constant 0 : i32
    return %c0_i32, %c0_i32_0 : i32, i32
  }
  func.func @transform_3(%arg0: i32, %arg1: i32) -> (i32, i32) {
    %c0_i32 = arith.constant 0 : i32
    %c0_i32_0 = arith.constant 0 : i32
    %c0_i32_1 = arith.constant 0 : i32
    return %c0_i32, %c0_i32_0 : i32, i32
  }
  func.func @transform_4(%arg0: i32, %arg1: i32) -> (i32, i32) {
    %c0_i32 = arith.constant 0 : i32
    %c0_i32_0 = arith.constant 0 : i32
    %c0_i32_1 = arith.constant 0 : i32
    return %c0_i32, %c0_i32_0 : i32, i32
  }
  func.func @transform_5(%arg0: i32, %arg1: i32) -> (i32, i32, i32) {
    %c0_i32 = arith.constant 0 : i32
    %c0_i32_0 = arith.constant 0 : i32
    %c0_i32_1 = arith.constant 0 : i32
    return %arg0, %c0_i32, %c0_i32_0 : i32, i32, i32
  }
}

</mosaic_0001>

<llo_original>
// kernel: tpu_custom_call.1
$region0: #{tpu_custom_call.1}
  #allocation0 [shape = 'u32[]', space=smem, size = 0x4, offset = 0x4, fixed_abs, tag = 'smem constant byte address 0x4 - core index']
  #allocation1 [shape = 'u32[144,128]{1,0:T(1,128)}', space=vmem, size = 0x12000, scoped, tag = 'internal scratch']
  %s0 = inlined_call_operand.hbm [shape: f32[4,512], index: 0, kind: input, shape index: {}]
  %s1 = inlined_call_operand.vmem [shape: f32[8,512], index: 1, kind: input, shape index: {}]
  %s2 = inlined_call_operand.vmem [shape: f32[8,4], index: 2, kind: input, shape index: {}]
  %s3 = inlined_call_operand.vmem [shape: f32[8,1], index: 3, kind: input, shape index: {}]
  %s4 = inlined_call_operand.vmem [shape: f32[16,8], index: 4, kind: input, shape index: {}]
  %s5 = inlined_call_operand.hbm [shape: f32[2,16,256], index: 5, kind: output, shape index: {}]
  %s6 = sld [smem:[#allocation0]]
  $region61: #{tpu_custom_call.1} parent=0
    _
  %s8 = ssub.s32 1, %s6
  %s9 = scalar_select 0, %s8, %s6
  $region1: #{tpu_custom_call.1} parent=0
    #allocation2 [shape = 'u8[8192]{0}', space=vmem, size = 0x2000, scoped, tag = 'input window, operand 0']
    #allocation3 [shape = 's32[2]{0}', space=sflag, size = 0x8, scoped, tag = 'scoped memory for tpu_custom_call.1']
    #allocation4 [shape = 's32[2]{0}', space=sflag, size = 0x8, scoped, tag = 'scoped memory for tpu_custom_call.1']
    #allocation5 [shape = 'u8[32768]{0}', space=vmem, size = 0x8000, scoped, tag = 'output window, operand 0']
    %10 = vsyncpa [#allocation3], 0
    %s11 = scalar_lea.sflag [#allocation3], 1
    %12 = vsyncpa %s11, 0
    %13 = vsyncpa [#allocation4], 0
    %s14 = scalar_lea.sflag [#allocation4], 1
    %15 = vsyncpa %s14, 0
    loop: start=0, step=1, limit=4
    $region2: #{tpu_custom_call.1} parent=1 // loop_pre_header
      _
    $region3: #{tpu_custom_call.1} parent=1 // loop_header
      %s17 = sphi 0, %s21
      %p18 = scmp.ge.s32.totalorder %s17, 4
      %s24 = sphi 0, %s36
      %s25 = sphi 0, %s32
      %s26 = sphi 0, %s24
      %s27 = sphi 0, %s25
      %s28 = sphi 0, %s26
      %s29 = sphi 0, %s27
      %s45 = sphi 0, %s47
      %s48 = sphi 0, %s45
      %s49 = sphi 0, %s48
      %s65 = sphi 0, %s49
      %s77 = sphi 0, %s79
      %s80 = sphi 0, %s77
      %s81 = sphi 0, %s80
      %s97 = sphi 0, %s81
      %s101 = sphi 0, %s101
      %s103 = sphi 0, %s101
      %s104 = sphi 0, %s103
      %s118 = sphi 0, %s104
      %s122 = sphi 0, %s122
      %s124 = sphi 0, %s122
      %s125 = sphi 0, %s124
      %s139 = sphi 0, %s125
      %s143 = sphi 0, %s143
      %s145 = sphi 0, %s143
      %s146 = sphi 0, %s145
      %s160 = sphi 0, %s146
      %s166 = sphi 0, %s168
      %s169 = sphi 0, %s166
      %s170 = sphi 0, %s169
      %s186 = sphi 0, %s170
    $region4: #{tpu_custom_call.1} parent=1 // loop_header_branch
      %20 = sbr.rel (%p18) target = $region8
    $region5: #{tpu_custom_call.1} parent=1 // loop_body
      %s22 = ssub.s32 %s17, 1
      %s23 = ssub.s32 %s17, 2
      %s30 = sadd.s32 1, %s25
      %p31 = scmp.ge.s32.totalorder %s30, 1
      %s32 = scalar_select %p31, 0, %s30
      %s33 = sadd.s32 1, %s24
      %s34 = scalar_select %p31, %s33, %s24
      %p35 = scmp.ge.s32.totalorder %s34, 2
      %s36 = scalar_select %p35, 0, %s34
      %s37 = sadd.s32 %s24, %s25
      %p38 = scmp.lt.s32.totalorder %s37, 1
      %s39 = scalar_select %p38, %s37, 1
      %s40 = sadd.s32 %s36, %s32
      %p41 = scmp.lt.s32.totalorder %s40, 1
      %s42 = scalar_select %p41, %s40, 1
      %s43 = ssub.s32 %s39, %s42
      %p44 = scmp.eq.s32.totalorder %s43, 0
      %s46 = sadd.s32 %s45, 1
      %s47 = scalar_select %p44, %s45, %s46
      %p50 = pneg %p44
      %p51 = scmp.eq.s32.totalorder %s17, 1
      %p52 = por %p50, %p51
      %p53 = scmp.ne.s32.totalorder %s45, %s48
      %p54 = scmp.eq.s32.totalorder %s17, 0
      %p55 = por %p53, %p54
      %p56 = scmp.ne.s32.totalorder %s45, %s48
      %p57 = scmp.eq.s32.totalorder %s22, 1
      %p58 = por %p56, %p57
      %p59 = scmp.ne.s32.totalorder %s48, %s49
      %p60 = scmp.eq.s32.totalorder %s22, 0
      %p61 = por %p59, %p60
      %p62 = scmp.ne.s32.totalorder %s48, %s49
      %p63 = scmp.eq.s32.totalorder %s23, 1
      %p64 = por %p62, %p63
      %p66 = scmp.ne.s32.totalorder %s49, %s65
      %p67 = scmp.eq.s32.totalorder %s23, 0
      %p68 = por %p66, %p67
      %s69 = sadd.s32 %s24, %s25
      %p70 = scmp.lt.s32.totalorder %s69, 1
      %s71 = scalar_select %p70, %s69, 1
      %s72 = sadd.s32 %s36, %s32
      %p73 = scmp.lt.s32.totalorder %s72, 1
      %s74 = scalar_select %p73, %s72, 1
      %s75 = ssub.s32 %s71, %s74
      %p76 = scmp.eq.s32.totalorder %s75, 0
      %s78 = sadd.s32 %s77, 1
      %s79 = scalar_select %p76, %s77, %s78
      %p82 = pneg %p76
      %p83 = scmp.eq.s32.totalorder %s17, 1
      %p84 = por %p82, %p83
      %p85 = scmp.ne.s32.totalorder %s77, %s80
      %p86 = scmp.eq.s32.totalorder %s17, 0
      %p87 = por %p85, %p86
      %p88 = scmp.ne.s32.totalorder %s77, %s80
      %p89 = scmp.eq.s32.totalorder %s22, 1
      %p90 = por %p88, %p89
      %p91 = scmp.ne.s32.totalorder %s80, %s81
      %p92 = scmp.eq.s32.totalorder %s22, 0
      %p93 = por %p91, %p92
      %p94 = scmp.ne.s32.totalorder %s80, %s81
      %p95 = scmp.eq.s32.totalorder %s23, 1
      %p96 = por %p94, %p95
      %p98 = scmp.ne.s32.totalorder %s81, %s97
      %p99 = scmp.eq.s32.totalorder %s23, 0
      %p100 = por %p98, %p99
      %s102 = sadd.s32 %s101, 1
      %p105 = scmp.eq.s32.totalorder %s17, 1
      %p106 = scmp.ne.s32.totalorder %s101, %s103
      %p107 = scmp.eq.s32.totalorder %s17, 0
      %p108 = por %p106, %p107
      %p109 = scmp.ne.s32.totalorder %s101, %s103
      %p110 = scmp.eq.s32.totalorder %s22, 1
      %p111 = por %p109, %p110
      %p112 = scmp.ne.s32.totalorder %s103, %s104
      %p113 = scmp.eq.s32.totalorder %s22, 0
      %p114 = por %p112, %p113
      %p115 = scmp.ne.s32.totalorder %s103, %s104
      %p116 = scmp.eq.s32.totalorder %s23, 1
      %p117 = por %p115, %p116
      %p119 = scmp.ne.s32.totalorder %s104, %s118
      %p120 = scmp.eq.s32.totalorder %s23, 0
      %p121 = por %p119, %p120
      %s123 = sadd.s32 %s122, 1
      %p126 = scmp.eq.s32.totalorder %s17, 1
      %p127 = scmp.ne.s32.totalorder %s122, %s124
      %p128 = scmp.eq.s32.totalorder %s17, 0
      %p129 = por %p127, %p128
      %p130 = scmp.ne.s32.totalorder %s122, %s124
      %p131 = scmp.eq.s32.totalorder %s22, 1
      %p132 = por %p130, %p131
      %p133 = scmp.ne.s32.totalorder %s124, %s125
      %p134 = scmp.eq.s32.totalorder %s22, 0
      %p135 = por %p133, %p134
      %p136 = scmp.ne.s32.totalorder %s124, %s125
      %p137 = scmp.eq.s32.totalorder %s23, 1
      %p138 = por %p136, %p137
      %p140 = scmp.ne.s32.totalorder %s125, %s139
      %p141 = scmp.eq.s32.totalorder %s23, 0
      %p142 = por %p140, %p141
      %s144 = sadd.s32 %s143, 1
      %p147 = scmp.eq.s32.totalorder %s17, 1
      %p148 = scmp.ne.s32.totalorder %s143, %s145
      %p149 = scmp.eq.s32.totalorder %s17, 0
      %p150 = por %p148, %p149
      %p151 = scmp.ne.s32.totalorder %s143, %s145
      %p152 = scmp.eq.s32.totalorder %s22, 1
      %p153 = por %p151, %p152
      %p154 = scmp.ne.s32.totalorder %s145, %s146
      %p155 = scmp.eq.s32.totalorder %s22, 0
      %p156 = por %p154, %p155
      %p157 = scmp.ne.s32.totalorder %s145, %s146
      %p158 = scmp.eq.s32.totalorder %s23, 1
      %p159 = por %p157, %p158
      %p161 = scmp.ne.s32.totalorder %s146, %s160
      %p162 = scmp.eq.s32.totalorder %s23, 0
      %p163 = por %p161, %p162
      %s164 = ssub.s32 %s24, %s36
      %p165 = scmp.eq.s32.totalorder %s164, 0
      %s167 = sadd.s32 %s166, 1
      %s168 = scalar_select %p165, %s166, %s167
      %p171 = pneg %p165
      %p172 = scmp.eq.s32.totalorder %s17, 1
      %p173 = por %p171, %p172
      %p174 = scmp.ne.s32.totalorder %s166, %s169
      %p175 = scmp.eq.s32.totalorder %s17, 0
      %p176 = por %p174, %p175
      %p177 = scmp.ne.s32.totalorder %s166, %s169
      %p178 = scmp.eq.s32.totalorder %s22, 1
      %p179 = por %p177, %p178
      %p180 = scmp.ne.s32.totalorder %s169, %s170
      %p181 = scmp.eq.s32.totalorder %s22, 0
      %p182 = por %p180, %p181
      %p183 = scmp.ne.s32.totalorder %s169, %s170
      %p184 = scmp.eq.s32.totalorder %s23, 1
      %p185 = por %p183, %p184
      %p187 = scmp.ne.s32.totalorder %s170, %s186
      %p188 = scmp.eq.s32.totalorder %s23, 0
      %p189 = por %p187, %p188
      %p190 = scmp.le.s32.totalorder 1, %s17
      %p191 = scmp.lt.s32.totalorder %s17, 3
      %p192 = pnand %p190, %p191
      %p193 = pneg %p192
      // Predicated region
      $region9: #{tpu_custom_call.1} parent=5 // pred_check
        _
      $region10: #{tpu_custom_call.1} parent=5 // pred_check_branch
        %195 = sbr.rel (%p192) target = $region12
      $region11: #{tpu_custom_call.1} parent=5 // pred_region
        %s196 = ssub.s32 %s17, 1
        // Predicated region
        $region13: #{tpu_custom_call.1} parent=11 // pred_check
          %p197 = pneg %p114
        $region14: #{tpu_custom_call.1} parent=11 // pred_check_branch
          %199 = sbr.rel (%p197) target = $region16
        $region15: #{tpu_custom_call.1} parent=11 // pred_region
          _
        $region16: #{tpu_custom_call.1} parent=11 // pred_fallthru
          _
        // Predicated region
        $region17: #{tpu_custom_call.1} parent=11 // pred_check
          %p200 = pneg %p135
        $region18: #{tpu_custom_call.1} parent=11 // pred_check_branch
          %202 = sbr.rel (%p200) target = $region20
        $region19: #{tpu_custom_call.1} parent=11 // pred_region
          _
        $region20: #{tpu_custom_call.1} parent=11 // pred_fallthru
          _
        // Predicated region
        $region21: #{tpu_custom_call.1} parent=11 // pred_check
          %p203 = pneg %p156
        $region22: #{tpu_custom_call.1} parent=11 // pred_check_branch
          %205 = sbr.rel (%p203) target = $region24
        $region23: #{tpu_custom_call.1} parent=11 // pred_region
          _
        $region24: #{tpu_custom_call.1} parent=11 // pred_fallthru
          _
      $region12: #{tpu_custom_call.1} parent=5 // pred_fallthru
        _
      %p206 = scmp.lt.s32.totalorder %s17, 2
      // Predicated region
      $region25: #{tpu_custom_call.1} parent=5 // pred_check
        %p207 = pneg %p206
      $region26: #{tpu_custom_call.1} parent=5 // pred_check_branch
        %209 = sbr.rel (%p207) target = $region28
      $region27: #{tpu_custom_call.1} parent=5 // pred_region
        // Predicated region
        $region29: #{tpu_custom_call.1} parent=27 // pred_check
          %p210 = pneg %p55
        $region30: #{tpu_custom_call.1} parent=27 // pred_check_branch
          %212 = sbr.rel (%p210) target = $region32
        $region31: #{tpu_custom_call.1} parent=27 // pred_region
          %s213 = sand.u32 %s45, 1
          %s214 = scalar_lea.sflag [#allocation3], %s213
          %s215 = sand.u32 %s45, 1
          %s216 = smul.addr %s215, 8
          %s217 = scalar_lea.vmem [#allocation2], %s216
          %s218 = sadd.s32 %s24, %s25
          %p219 = scmp.lt.s32.totalorder %s218, 1
          %s220 = scalar_select %p219, %s218, 1
          %s221 = smul.u32 2, %s220
          %s223 = ssub.s32 128, 128
          %224 = vsyncadd %s214, %s223
          %s225 = smul.addr %s221, 64
          %s226 = scalar_lea.hbm %s0, %s225
          %s228 = sshll.u32 %s217, 4
          %s229 = int_to_ptr.vmem [resolvable:$true] %s228
          %231 = dma.hbm_to_vmem [thread:$0]  %s226, 128, %s229, %s214
        $region32: #{tpu_custom_call.1} parent=27 // pred_fallthru
          _
        // Predicated region
        $region33: #{tpu_custom_call.1} parent=27 // pred_check
          %p232 = pneg %p87
        $region34: #{tpu_custom_call.1} parent=27 // pred_check_branch
          %234 = sbr.rel (%p232) target = $region36
        $region35: #{tpu_custom_call.1} parent=27 // pred_region
          %s235 = sadd.s32 %s24, %s25
          %p236 = scmp.lt.s32.totalorder %s235, 1
          %s237 = scalar_select %p236, %s235, 1
          %s238 = smul.u32 2, %s237
          %p239 = scmp.lt.s32.totalorder %s238, 3
          %s240 = scalar_select %p239, %s238, 3
          %s241 = smul.addr %s240, 8
          %s242 = scalar_lea.vmem %s1, %s241
          %s243 = sadd.s32 %s24, %s25
          %p244 = scmp.lt.s32.totalorder %s243, 1
          %s245 = scalar_select %p244, %s243, 1
          %s246 = smul.u32 2, %s245
        $region36: #{tpu_custom_call.1} parent=27 // pred_fallthru
          _
      $region28: #{tpu_custom_call.1} parent=5 // pred_fallthru
        _
      %p247 = scmp.le.s32.totalorder 1, %s17
      %p248 = scmp.lt.s32.totalorder %s17, 3
      %p249 = pnand %p247, %p248
      %p250 = pneg %p249
      // Predicated region
      $region37: #{tpu_custom_call.1} parent=5 // pred_check
        _
      $region38: #{tpu_custom_call.1} parent=5 // pred_check_branch
        %252 = sbr.rel (%p249) target = $region40
      $region39: #{tpu_custom_call.1} parent=5 // pred_region
        %s253 = ssub.s32 %s17, 1
        %s254 = sand.u32 %s48, 1
        %s255 = scalar_lea.sflag [#allocation3], %s254
        %s256 = sand.u32 %s48, 1
        %s257 = smul.addr %s256, 8
        %s258 = scalar_lea.vmem [#allocation2], %s257
        // Predicated region
        $region41: #{tpu_custom_call.1} parent=39 // pred_check
          %p259 = pneg %p61
        $region42: #{tpu_custom_call.1} parent=39 // pred_check_branch
          %261 = sbr.rel (%p259) target = $region44
        $region43: #{tpu_custom_call.1} parent=39 // pred_region
          %262 = dma.done %s255, 128
        $region44: #{tpu_custom_call.1} parent=39 // pred_fallthru
          _
        %s263 = sand.u32 %s48, 1
        %s264 = scalar_lea.sflag [#allocation3], %s263
        %s265 = sand.u32 %s48, 1
        %s266 = smul.addr %s265, 8
        %s267 = scalar_lea.vmem [#allocation2], %s266
        %p268 = pneg %p61
        %p269 = pneg %p58
        %s270 = sadd.s32 %s26, %s27
        %p271 = scmp.lt.s32.totalorder %s270, 1
        %s272 = scalar_select %p271, %s270, 1
        %s273 = smul.u32 2, %s272
        %p274 = scmp.lt.s32.totalorder %s273, 3
        %s275 = scalar_select %p274, %s273, 3
        %s276 = smul.addr %s275, 8
        %s277 = scalar_lea.vmem %s1, %s276
        %p278 = pneg %p93
        %p279 = pneg %p90
        %p280 = pneg %p114
        %p281 = pneg %p111
        %p282 = pneg %p135
        %p283 = pneg %p132
        %p284 = pneg %p156
        %p285 = pneg %p153
        %p286 = pneg %p182
        %p287 = pneg %p179
        %s288 = sand.u32 %s169, 1
        %s289 = scalar_lea.sflag [#allocation4], %s288
        %s290 = sand.u32 %s169, 1
        %s291 = smul.addr %s290, 32
        %s292 = scalar_lea.vmem [#allocation5], %s291
        %s293 = sadd.s32 %s26, %s27
        %p294 = scmp.lt.s32.totalorder %s293, 1
        %s295 = scalar_select %p294, %s293, 1
        %s296 = smul.u32 2, %s295
        %s297 = sadd.s32 %s26, %s27
        %p298 = scmp.lt.s32.totalorder %s297, 1
        %s299 = scalar_select %p298, %s297, 1
        %s300 = smul.u32 2, %s299
        %p301 = scmp.lt.s32.totalorder %s300, 3
        %s302 = scalar_select %p301, %s300, 3
        %s303 = smul.addr %s302, 8
        %s304 = scalar_lea.vmem %s1, %s303
        %s305 = sadd.s32 %s26, %s27
        %p306 = scmp.lt.s32.totalorder %s305, 1
        %s307 = scalar_select %p306, %s305, 1
        %s308 = smul.u32 2, %s307
        %p309 = scmp.eq.s32.totalorder %s27, 0
        // Predicated region
        $region45: #{tpu_custom_call.1} parent=39 // pred_check
          %p310 = pneg %p309
        $region46: #{tpu_custom_call.1} parent=39 // pred_check_branch
          %312 = sbr.rel (%p310) target = $region48
        $region47: #{tpu_custom_call.1} parent=39 // pred_region
          %313 = vst [vmem:[%s292] sm:$0xff] 0.0
          %314 = vst [vmem:[%s292 + $0x8] sm:$0xff] 0.0
          %315 = vst [vmem:[%s292 + $0x10] sm:$0xff] 0.0
          %316 = vst [vmem:[%s292 + $0x18] sm:$0xff] 0.0
        $region48: #{tpu_custom_call.1} parent=39 // pred_fallthru
          _
        %v317 = vld [vmem:[%s2] sm:$0xff]
        %v318 = vld [vmem:[%s258] sm:$0xff]
        %v319 = vld [vmem:[%s3] sm:$0xff]
        %321 = vset.pattern.permute.xlu0 0
        %322 = vperm.xlu0 %321, %v319
        %v323 = vpop.permute.xlu0 %322
        %v326 = vcombine.high %v318, %v318
        %vm327 = vcmask 31744
        %v329 = vsel %vm327, %v317, 0
        %vm331 = vcmask 1043456
        %v332 = vsel %vm331, %v318, 0
        %v334 = vsel %vm331, %v326, 0
        %336 = vmatprep.subr.mxu0 0.0
        %337 = vmatpush1.msra.mxu0 0.0
        %338 = vmatprep.subr.mxu0 0.0
        %339 = vmatpush1.msra.mxu0 0.0
        %340 = vmatprep.subr.mxu0 0.0
        %341 = vmatpush1.msra.mxu0 0.0
        %342 = vmatprep.subr.mxu0 0.0
        %343 = vmatpush1.msra.mxu0 0.0
        %344 = vmatprep.subr.mxu0 0.0
        %345 = vmatpush1.msra.mxu0 0.0
        %346 = vmatprep.subr.mxu0 0.0
        %347 = vmatpush1.msra.mxu0 0.0
        %348 = vmatprep.subr.mxu0 0.0
        %349 = vmatpush1.msra.mxu0 0.0
        %350 = vmatprep.subr.mxu0 0.0
        %351 = vmatpush1.msra.mxu0 0.0
        %352 = vmatprep.subr.mxu0 0.0
        %353 = vmatpush1.msra.mxu0 0.0
        %354 = vmatprep.subr.mxu0 0.0
        %355 = vmatpush1.msra.mxu0 0.0
        %356 = vmatprep.subr.mxu0 0.0
        %357 = vmatpush1.msra.mxu0 0.0
        %358 = vmatprep.subr.mxu0 0.0
        %359 = vmatpush1.msra.mxu0 0.0
        %360 = vmatprep.subr.mxu0 0.0
        %361 = vmatpush1.msra.mxu0 0.0
        %362 = vmatprep.subr.mxu0 0.0
        %363 = vmatpush1.msra.mxu0 0.0
        %364 = vmatprep.subr.mxu0 0.0
        %365 = vmatpush1.msra.mxu0 0.0
        %366 = vmatprep.subr.mxu0 %v334
        %367 = vmatpush1.msra.mxu0 %v332
        %368 = vmatprep.subr.mxu0 0.0
        %369 = vmatpush2.msra.mxu0 0.0
        %370 = vmatprep.subr.mxu0 0.0
        %371 = vmatpush2.msra.mxu0 0.0
        %372 = vmatprep.subr.mxu0 0.0
        %373 = vmatpush2.msra.mxu0 0.0
        %374 = vmatprep.subr.mxu0 0.0
        %375 = vmatpush2.msra.mxu0 0.0
        %376 = vmatprep.subr.mxu0 0.0
        %377 = vmatpush2.msra.mxu0 0.0
        %378 = vmatprep.subr.mxu0 0.0
        %379 = vmatpush2.msra.mxu0 0.0
        %380 = vmatprep.subr.mxu0 0.0
        %381 = vmatpush2.msra.mxu0 0.0
        %382 = vmatprep.subr.mxu0 0.0
        %383 = vmatpush2.msra.mxu0 0.0
        %384 = vmatprep.subr.mxu0 0.0
        %385 = vmatpush2.msra.mxu0 0.0
        %386 = vmatprep.subr.mxu0 0.0
        %387 = vmatpush2.msra.mxu0 0.0
        %388 = vmatprep.subr.mxu0 0.0
        %389 = vmatpush2.msra.mxu0 0.0
        %390 = vmatprep.subr.mxu0 0.0
        %391 = vmatpush2.msra.mxu0 0.0
        %392 = vmatprep.subr.mxu0 0.0
        %393 = vmatpush2.msra.mxu0 0.0
        %394 = vmatprep.subr.mxu0 0.0
        %395 = vmatpush2.msra.mxu0 0.0
        %396 = vmatprep.subr.mxu0 0.0
        %397 = vmatpush2.msra.mxu0 0.0
        %398 = vmatprep.subr.mxu0 0.0
        %399 = vmatpush2.msra.mxu0 0.0
        %400 = vmatprep.mubr.f32.mxu0 0.0
        %401 = vmatmul.mubr.f32.gmra.mxu0 %v329
        %v402 = vpop.f32.mrf.mxu0
        %v403 = vadd.f32 %v323, %v402
        %v404 = vpop.f32.mrf.mxu0
        %v405 = vadd.f32 %v323, %v404
        %406 = vdwg.mxu0
        %v407 = vmax.f32 %v403, 0.0
        %v408 = vmax.f32 %v405, 0.0
        %v409 = vld [vmem:[%s304] sm:$0xff]
        %v410 = vld [vmem:[%s304 + $0x8] sm:$0xff]
        %v411 = vsub.f32 %v407, %v409
        %v412 = vsub.f32 %v408, %v410
        %v413 = vld [vmem:[%s4] sm:$0xff]
        %v414 = vld [vmem:[%s4 + $0x8] sm:$0xff]
        %vm415 = vcmask 64512
        %v417 = vsel %vm415, %v413, 0
        %v420 = vsel %vm415, %v414, 0
        %422 = vmatprep.subr.mxu0 0.0
        %423 = vmatpush1.msra.mxu0 0.0
        %424 = vmatprep.subr.mxu0 0.0
        %425 = vmatpush1.msra.mxu0 0.0
        %426 = vmatprep.subr.mxu0 0.0
        %427 = vmatpush1.msra.mxu0 0.0
        %428 = vmatprep.subr.mxu0 0.0
        %429 = vmatpush1.msra.mxu0 0.0
        %430 = vmatprep.subr.mxu0 0.0
        %431 = vmatpush1.msra.mxu0 0.0
        %432 = vmatprep.subr.mxu0 0.0
        %433 = vmatpush1.msra.mxu0 0.0
        %434 = vmatprep.subr.mxu0 0.0
        %435 = vmatpush1.msra.mxu0 0.0
        %436 = vmatprep.subr.mxu0 0.0
        %437 = vmatpush1.msra.mxu0 0.0
        %438 = vmatprep.subr.mxu0 0.0
        %439 = vmatpush1.msra.mxu0 0.0
        %440 = vmatprep.subr.mxu0 0.0
        %441 = vmatpush1.msra.mxu0 0.0
        %442 = vmatprep.subr.mxu0 0.0
        %443 = vmatpush1.msra.mxu0 0.0
        %444 = vmatprep.subr.mxu0 0.0
        %445 = vmatpush1.msra.mxu0 0.0
        %446 = vmatprep.subr.mxu0 0.0
        %447 = vmatpush1.msra.mxu0 0.0
        %448 = vmatprep.subr.mxu0 0.0
        %449 = vmatpush1.msra.mxu0 0.0
        %450 = vmatprep.subr.mxu0 0.0
        %451 = vmatpush1.msra.mxu0 0.0
        %452 = vmatprep.subr.mxu0 %v412
        %453 = vmatpush1.msra.mxu0 %v411
        %454 = vmatprep.subr.mxu0 0.0
        %455 = vmatpush2.msra.mxu0 0.0
        %456 = vmatprep.subr.mxu0 0.0
        %457 = vmatpush2.msra.mxu0 0.0
        %458 = vmatprep.subr.mxu0 0.0
        %459 = vmatpush2.msra.mxu0 0.0
        %460 = vmatprep.subr.mxu0 0.0
        %461 = vmatpush2.msra.mxu0 0.0
        %462 = vmatprep.subr.mxu0 0.0
        %463 = vmatpush2.msra.mxu0 0.0
        %464 = vmatprep.subr.mxu0 0.0
        %465 = vmatpush2.msra.mxu0 0.0
        %466 = vmatprep.subr.mxu0 0.0
        %467 = vmatpush2.msra.mxu0 0.0
        %468 = vmatprep.subr.mxu0 0.0
        %469 = vmatpush2.msra.mxu0 0.0
        %470 = vmatprep.subr.mxu0 0.0
        %471 = vmatpush2.msra.mxu0 0.0
        %472 = vmatprep.subr.mxu0 0.0
        %473 = vmatpush2.msra.mxu0 0.0
        %474 = vmatprep.subr.mxu0 0.0
        %475 = vmatpush2.msra.mxu0 0.0
        %476 = vmatprep.subr.mxu0 0.0
        %477 = vmatpush2.msra.mxu0 0.0
        %478 = vmatprep.subr.mxu0 0.0
        %479 = vmatpush2.msra.mxu0 0.0
        %480 = vmatprep.subr.mxu0 0.0
        %481 = vmatpush2.msra.mxu0 0.0
        %482 = vmatprep.subr.mxu0 0.0
        %483 = vmatpush2.msra.mxu0 0.0
        %484 = vmatprep.subr.mxu0 0.0
        %485 = vmatpush2.msra.mxu0 0.0
        %486 = vmatprep.mubr.f32.mxu0 0.0
        %487 = vmatmul.mubr.f32.gmra.mxu0 %v417
        %v488 = vpop.f32.mrf.mxu0
        %v489 = vadd.f32 0.0, %v488
        %v490 = vpop.f32.mrf.mxu0
        %v491 = vadd.f32 0.0, %v490
        %492 = vmatprep.mubr.f32.mxu0 0.0
        %493 = vmatmul.mubr.f32.gmra.mxu0 %v420
        %v494 = vpop.f32.mrf.mxu0
        %v495 = vadd.f32 0.0, %v494
        %v496 = vpop.f32.mrf.mxu0
        %v497 = vadd.f32 0.0, %v496
        %498 = vdwg.mxu0
        %s499 = sadd.s32 %s26, %s27
        %s500 = smul.u32 %s499, 256
        %v501 = vlaneseq
        %v502 = vand.u32 %v501, 127
        %v503 = vadd.s32 %v502, 128
        %v504 = vstv %s500
        %v505 = vadd.s32 %v504, %v502
        %v506 = vadd.s32 %v504, %v503
        %vm507 = vcmp.lt.s32.totalorder %v505, 512
        %vm508 = vcmp.lt.s32.totalorder %v506, 512
        %v509 = vmul.f32 %v489, %v489
        %v510 = vmul.f32 %v491, %v491
        %v511 = vmul.f32 %v495, %v495
        %v512 = vmul.f32 %v497, %v497
        %v513 = vsel %vm507, 1, 0
        %v514 = vsel %vm508, 1, 0
        %vm515 = vcmp.eq.s32.totalorder %v513, 1
        %vm516 = vcmp.eq.s32.totalorder %v514, 1
        %v517 = vsel %vm515, %v509, 0.0
        %v518 = vsel %vm516, %v510, 0.0
        %v519 = vsel %vm515, %v511, 0.0
        %v520 = vsel %vm516, %v512, 0.0
        %v521 = vld [vmem:[%s292] sm:$0xff]
        %v522 = vld [vmem:[%s292 + $0x8] sm:$0xff]
        %v523 = vld [vmem:[%s292 + $0x10] sm:$0xff]
        %v524 = vld [vmem:[%s292 + $0x18] sm:$0xff]
        %v525 = vadd.f32 %v521, %v517
        %v526 = vadd.f32 %v522, %v518
        %v527 = vadd.f32 %v523, %v519
        %v528 = vadd.f32 %v524, %v520
        %529 = vst [vmem:[%s292] sm:$0xff] %v525
        %530 = vst [vmem:[%s292 + $0x8] sm:$0xff] %v526
        %531 = vst [vmem:[%s292 + $0x10] sm:$0xff] %v527
        %532 = vst [vmem:[%s292 + $0x18] sm:$0xff] %v528
        %s533 = sand.u32 %s169, 1
        %s534 = scalar_lea.sflag [#allocation4], %s533
        %s535 = sand.u32 %s169, 1
        %s536 = smul.addr %s535, 32
        %s537 = scalar_lea.vmem [#allocation5], %s536
        // Predicated region
        $region49: #{tpu_custom_call.1} parent=39 // pred_check
          %p538 = pneg %p179
        $region50: #{tpu_custom_call.1} parent=39 // pred_check_branch
          %540 = sbr.rel (%p538) target = $region52
        $region51: #{tpu_custom_call.1} parent=39 // pred_region
          %s542 = ssub.s32 512, 512
          %543 = vsyncadd %s534, %s542
          %s544 = smul.addr %s26, 4
          %s545 = smul.addr %s544, 128
          %s546 = scalar_lea.hbm %s5, %s545
          %s547 = sshll.u32 %s537, 4
          %s548 = int_to_ptr.vmem [resolvable:$true] %s547
          %553 = dma.vmem_to_hbm [thread:$0]  %s548, 512, %s546, %s534, 256, 256, 16
        $region52: #{tpu_custom_call.1} parent=39 // pred_fallthru
          _
      $region40: #{tpu_custom_call.1} parent=5 // pred_fallthru
        _
      %p554 = scmp.le.s32.totalorder 2, %s17
      // Predicated region
      $region53: #{tpu_custom_call.1} parent=5 // pred_check
        %p555 = pneg %p554
      $region54: #{tpu_custom_call.1} parent=5 // pred_check_branch
        %557 = sbr.rel (%p555) target = $region56
      $region55: #{tpu_custom_call.1} parent=5 // pred_region
        %s558 = ssub.s32 %s17, 2
        // Predicated region
        $region57: #{tpu_custom_call.1} parent=55 // pred_check
          %p559 = pneg %p185
        $region58: #{tpu_custom_call.1} parent=55 // pred_check_branch
          %561 = sbr.rel (%p559) target = $region60
        $region59: #{tpu_custom_call.1} parent=55 // pred_region
          %s562 = sand.u32 %s170, 1
          %s563 = scalar_lea.sflag [#allocation4], %s562
          %s564 = sand.u32 %s170, 1
          %s565 = smul.addr %s564, 32
          %s566 = scalar_lea.vmem [#allocation5], %s565
          %567 = dma.done %s563, 512
        $region60: #{tpu_custom_call.1} parent=55 // pred_fallthru
          _
      $region56: #{tpu_custom_call.1} parent=5 // pred_fallthru
        _
    $region6: #{tpu_custom_call.1} parent=1 // loop_footer
      %s21 = sadd.s32 1, %s17
    $region7: #{tpu_custom_call.1} parent=1 // loop_footer_branch
      %16 = sbr.rel target = $region3
    $region8: #{tpu_custom_call.1} parent=1 // loop_exit
      _
    %568 = vsyncpa [#allocation3], 1
    %s569 = scalar_lea.sflag [#allocation3], 1
    %570 = vsyncpa %s569, 1
    %571 = vsyncpa [#allocation4], 1
    %s572 = scalar_lea.sflag [#allocation4], 1
    %573 = vsyncpa %s572, 1

</llo_original>
